<compile_context>
chip_gen: v7x
topology: tpu7x:2x2x1
jax: 0.10.0
libtpu: 0.0.40
codegen_flags: <defaults>
</compile_context>

<pallas_src>
import functools

import jax
import jax.numpy as jnp
from jax.experimental import pallas as pl
from jax.experimental.pallas import tpu as pltpu

LANES = 128  # vreg lane width


def _sigmoid(z, approx):
    if approx:
        # exp and the approximate reciprocal both land on the EUP slot
        # (no precise divide on the VPU).  Slightly changes numerics.
        return pl.reciprocal(1.0 + jnp.exp(-z), approx=True)
    return jax.nn.sigmoid(z)


def simplenn_kernel(xT_ref, w1_ref, b1_ref, w2_ref, b2_ref, oT_ref, *, approx_sigmoid):
    # xT_ref: (in_f, rb, 128) VMEM block — batch on (sublane-rows, lanes).
    # w1_ref: (h_f, in_f), b1_ref: (h_f,), w2_ref: (out_f, h_f), b2_ref: (out_f,)
    #   -> tiny, grid-invariant, resident in SMEM; read as scalars, broadcast on the VPU.
    x = xT_ref[...].astype(jnp.float32)            # (in_f, rb, 128)
    h_f, in_f = w1_ref.shape
    out_f, _ = w2_ref.shape

    # fc1 + sigmoid: unrolled K=3 scalar-broadcast FMAs on full (rb,128) vreg tiles.
    h1 = []
    for j in range(h_f):
        z = b1_ref[j] + w1_ref[j, 0] * x[0]
        for k in range(1, in_f):
            z = z + w1_ref[j, k] * x[k]
        h1.append(_sigmoid(z, approx_sigmoid))     # (rb, 128)

    # fc2 + sigmoid: unrolled K=4 scalar-broadcast FMAs, lane-dense full-row stores.
    for i in range(out_f):
        z = b2_ref[i] + w2_ref[i, 0] * h1[0]
        for j in range(1, h_f):
            z = z + w2_ref[i, j] * h1[j]
        oT_ref[i] = _sigmoid(z, approx_sigmoid).astype(oT_ref.dtype)


def simplenn_forward(x, w1, b1, w2, b2, *, block_b=128 * 1024, approx_sigmoid=False):
    """x: (B, 3) float32 (PyTorch convention). Weights torch-native:
    w1 (4, 3), b1 (4,), w2 (2, 4), b2 (2,). Returns (B, 2) float32."""
    B, in_f = x.shape
    h_f = w1.shape[0]
    out_f = w2.shape[0]

    # Rows of 128 lanes per grid step (multiple of 8 sublanes); ~block_b samples/step.
    rows_per_block = max(8, (block_b // LANES) // 8 * 8)
    rows_needed = -(-B // LANES)                   # ceil(B / 128)
    rb = min(rows_per_block, rows_needed)
    num_blocks = -(-rows_needed // rb)             # ceil
    R = num_blocks * rb                            # rb divides R exactly -> no partial blocks
    Bp = R * LANES

    # Pad + transpose + reshape as one fused XLA pass: (B,3) -> (3, R, 128).
    xT3 = jnp.pad(x.astype(jnp.float32), ((0, Bp - B), (0, 0))).T.reshape(in_f, R, LANES)

    grid = (num_blocks,)

    oT3 = pl.pallas_call(
        functools.partial(simplenn_kernel, approx_sigmoid=approx_sigmoid),
        out_shape=jax.ShapeDtypeStruct((out_f, R, LANES), jnp.float32),
        grid=grid,
        in_specs=[
            # Activations: tiled along batch rows; leading (feature) dim is full extent.
            pl.BlockSpec((in_f, rb, LANES), lambda i: (0, i, 0)),
            # Parameters: whole arrays in SMEM, grid-invariant (no per-step DMA).
            pl.BlockSpec(memory_space=pltpu.MemorySpace.SMEM),
            pl.BlockSpec(memory_space=pltpu.MemorySpace.SMEM),
            pl.BlockSpec(memory_space=pltpu.MemorySpace.SMEM),
            pl.BlockSpec(memory_space=pltpu.MemorySpace.SMEM),
        ],
        out_specs=pl.BlockSpec((out_f, rb, LANES), lambda i: (0, i, 0)),
        compiler_params=pltpu.CompilerParams(
            dimension_semantics=("parallel",),     # shards batch tiles across v7x's 2 TCs
        ),
    )(xT3, w1, b1, w2, b2)

    # Single fused pass back to (B, 2).
    return oT3.reshape(out_f, Bp)[:, :B].T


def init_params(key):
    # Deterministic init mimicking nn.Linear's uniform(-1/sqrt(fan_in), 1/sqrt(fan_in)),
    # stored torch-native as (out_features, in_features).
    k1, k2, k3, k4 = jax.random.split(key, 4)
    bound1 = 1.0 / jnp.sqrt(3.0)
    bound2 = 1.0 / jnp.sqrt(4.0)
    w1 = jax.random.uniform(k1, (4, 3), jnp.float32, -bound1, bound1)
    b1 = jax.random.uniform(k2, (4,), jnp.float32, -bound1, bound1)
    w2 = jax.random.uniform(k3, (2, 4), jnp.float32, -bound2, bound2)
    b2 = jax.random.uniform(k4, (2,), jnp.float32, -bound2, bound2)
    return w1, b1, w2, b2


def _ref_forward(x, w1, b1, w2, b2):
    # Pure-JAX reference, same math as the PyTorch forward (torch-native layouts).
    return jax.nn.sigmoid(jax.nn.sigmoid(x @ w1.T + b1) @ w2.T + b2)


if __name__ == "__main__":
    key = jax.random.PRNGKey(0)
    kx, kx2, kp = jax.random.split(key, 3)
    w1, b1, w2, b2 = init_params(kp)

    # Small demo batch.
    B = 64
    x = jax.random.normal(kx, (B, 3), jnp.float32)
    out = jax.block_until_ready(simplenn_forward(x, w1, b1, w2, b2))
    ref = _ref_forward(x, w1, b1, w2, b2)
    assert out.shape == (B, 2)
    assert jnp.allclose(out, ref, atol=1e-5, rtol=1e-5)

    # Second small batch that is not a multiple of 128 — exercises the padding path.
    B2 = 300
    x2 = jax.random.normal(kx2, (B2, 3), jnp.float32)
    out2 = jax.block_until_ready(simplenn_forward(x2, w1, b1, w2, b2))
    ref2 = _ref_forward(x2, w1, b1, w2, b2)
    assert out2.shape == (B2, 2)
    assert jnp.allclose(out2, ref2, atol=1e-5, rtol=1e-5)

    print("KERNEL_OK")
</pallas_src>

<mosaic_0001>
module attributes {stable_mosaic.version = 11 : i64} {
  func.func @simplenn_kernel(%arg0: i32, %arg1: memref<3x1x128xf32, #tpu.memory_space<vmem>>, %arg2: memref<4x3xf32, #tpu.memory_space<smem>>, %arg3: memref<4xf32, #tpu.memory_space<smem>>, %arg4: memref<2x4xf32, #tpu.memory_space<smem>>, %arg5: memref<2xf32, #tpu.memory_space<smem>>, %arg6: memref<2x1x128xf32, #tpu.memory_space<vmem>>) attributes {dimension_semantics = [#tpu.dimension_semantics<parallel>], iteration_bounds = array<i64: 1>, scalar_prefetch = 0 : i64, scratch_operands = 0 : i64, tpu.core_type = #tpu.core_type<tc>, window_params = [{transform_indices = @transform_0, window_bounds = array<i64: 3, 1, 128>}, {transform_indices = @transform_1, window_bounds = array<i64: 4, 3>}, {transform_indices = @transform_2, window_bounds = array<i64: 4>}, {transform_indices = @transform_3, window_bounds = array<i64: 2, 4>}, {transform_indices = @transform_4, window_bounds = array<i64: 2>}, {transform_indices = @transform_5, window_bounds = array<i64: 2, 1, 128>}]} {
    %c0 = arith.constant 0 : index
    %c0_0 = arith.constant 0 : index
    %c0_1 = arith.constant 0 : index
    %0 = vector.load %arg1[%c0, %c0_0, %c0_1] : memref<3x1x128xf32, #tpu.memory_space<vmem>>, vector<3x1x128xf32>
    %c0_2 = arith.constant 0 : index
    %1 = memref.load %arg3[%c0_2] : memref<4xf32, #tpu.memory_space<smem>>
    %c0_3 = arith.constant 0 : index
    %c0_4 = arith.constant 0 : index
    %2 = memref.load %arg2[%c0_3, %c0_4] : memref<4x3xf32, #tpu.memory_space<smem>>
    %3 = vector.extract_strided_slice %0 {offsets = [0, 0, 0], sizes = [1, 1, 128], strides = [1, 1, 1]} : vector<3x1x128xf32> to vector<1x1x128xf32>
    %4 = vector.shape_cast %3 : vector<1x1x128xf32> to vector<1x128xf32>
    %5 = vector.broadcast %2 : f32 to vector<1x128xf32>
    %6 = arith.mulf %5, %4 : vector<1x128xf32>
    %7 = vector.broadcast %1 : f32 to vector<1x128xf32>
    %8 = arith.addf %7, %6 : vector<1x128xf32>
    %c0_5 = arith.constant 0 : index
    %c1 = arith.constant 1 : index
    %9 = memref.load %arg2[%c0_5, %c1] : memref<4x3xf32, #tpu.memory_space<smem>>
    %10 = vector.extract_strided_slice %0 {offsets = [1, 0, 0], sizes = [1, 1, 128], strides = [1, 1, 1]} : vector<3x1x128xf32> to vector<1x1x128xf32>
    %11 = vector.shape_cast %10 : vector<1x1x128xf32> to vector<1x128xf32>
    %12 = vector.broadcast %9 : f32 to vector<1x128xf32>
    %13 = arith.mulf %12, %11 : vector<1x128xf32>
    %14 = arith.addf %8, %13 : vector<1x128xf32>
    %c0_6 = arith.constant 0 : index
    %c2 = arith.constant 2 : index
    %15 = memref.load %arg2[%c0_6, %c2] : memref<4x3xf32, #tpu.memory_space<smem>>
    %16 = vector.extract_strided_slice %0 {offsets = [2, 0, 0], sizes = [1, 1, 128], strides = [1, 1, 1]} : vector<3x1x128xf32> to vector<1x1x128xf32>
    %17 = vector.shape_cast %16 : vector<1x1x128xf32> to vector<1x128xf32>
    %18 = vector.broadcast %15 : f32 to vector<1x128xf32>
    %19 = arith.mulf %18, %17 : vector<1x128xf32>
    %20 = arith.addf %14, %19 : vector<1x128xf32>
    %21 = arith.negf %20 : vector<1x128xf32>
    %22 = math.exp %21 : vector<1x128xf32>
    %cst = arith.constant 1.000000e+00 : f32
    %23 = vector.broadcast %cst : f32 to vector<1x128xf32>
    %24 = arith.addf %23, %22 : vector<1x128xf32>
    %25 = arith.divf %23, %24 : vector<1x128xf32>
    %c1_7 = arith.constant 1 : index
    %26 = memref.load %arg3[%c1_7] : memref<4xf32, #tpu.memory_space<smem>>
    %c1_8 = arith.constant 1 : index
    %c0_9 = arith.constant 0 : index
    %27 = memref.load %arg2[%c1_8, %c0_9] : memref<4x3xf32, #tpu.memory_space<smem>>
    %28 = vector.extract_strided_slice %0 {offsets = [0, 0, 0], sizes = [1, 1, 128], strides = [1, 1, 1]} : vector<3x1x128xf32> to vector<1x1x128xf32>
    %29 = vector.shape_cast %28 : vector<1x1x128xf32> to vector<1x128xf32>
    %30 = vector.broadcast %27 : f32 to vector<1x128xf32>
    %31 = arith.mulf %30, %29 : vector<1x128xf32>
    %32 = vector.broadcast %26 : f32 to vector<1x128xf32>
    %33 = arith.addf %32, %31 : vector<1x128xf32>
    %c1_10 = arith.constant 1 : index
    %c1_11 = arith.constant 1 : index
    %34 = memref.load %arg2[%c1_10, %c1_11] : memref<4x3xf32, #tpu.memory_space<smem>>
    %35 = vector.extract_strided_slice %0 {offsets = [1, 0, 0], sizes = [1, 1, 128], strides = [1, 1, 1]} : vector<3x1x128xf32> to vector<1x1x128xf32>
    %36 = vector.shape_cast %35 : vector<1x1x128xf32> to vector<1x128xf32>
    %37 = vector.broadcast %34 : f32 to vector<1x128xf32>
    %38 = arith.mulf %37, %36 : vector<1x128xf32>
    %39 = arith.addf %33, %38 : vector<1x128xf32>
    %c1_12 = arith.constant 1 : index
    %c2_13 = arith.constant 2 : index
    %40 = memref.load %arg2[%c1_12, %c2_13] : memref<4x3xf32, #tpu.memory_space<smem>>
    %41 = vector.extract_strided_slice %0 {offsets = [2, 0, 0], sizes = [1, 1, 128], strides = [1, 1, 1]} : vector<3x1x128xf32> to vector<1x1x128xf32>
    %42 = vector.shape_cast %41 : vector<1x1x128xf32> to vector<1x128xf32>
    %43 = vector.broadcast %40 : f32 to vector<1x128xf32>
    %44 = arith.mulf %43, %42 : vector<1x128xf32>
    %45 = arith.addf %39, %44 : vector<1x128xf32>
    %46 = arith.negf %45 : vector<1x128xf32>
    %47 = math.exp %46 : vector<1x128xf32>
    %cst_14 = arith.constant 1.000000e+00 : f32
    %48 = vector.broadcast %cst_14 : f32 to vector<1x128xf32>
    %49 = arith.addf %48, %47 : vector<1x128xf32>
    %50 = arith.divf %48, %49 : vector<1x128xf32>
    %c2_15 = arith.constant 2 : index
    %51 = memref.load %arg3[%c2_15] : memref<4xf32, #tpu.memory_space<smem>>
    %c2_16 = arith.constant 2 : index
    %c0_17 = arith.constant 0 : index
    %52 = memref.load %arg2[%c2_16, %c0_17] : memref<4x3xf32, #tpu.memory_space<smem>>
    %53 = vector.extract_strided_slice %0 {offsets = [0, 0, 0], sizes = [1, 1, 128], strides = [1, 1, 1]} : vector<3x1x128xf32> to vector<1x1x128xf32>
    %54 = vector.shape_cast %53 : vector<1x1x128xf32> to vector<1x128xf32>
    %55 = vector.broadcast %52 : f32 to vector<1x128xf32>
    %56 = arith.mulf %55, %54 : vector<1x128xf32>
    %57 = vector.broadcast %51 : f32 to vector<1x128xf32>
    %58 = arith.addf %57, %56 : vector<1x128xf32>
    %c2_18 = arith.constant 2 : index
    %c1_19 = arith.constant 1 : index
    %59 = memref.load %arg2[%c2_18, %c1_19] : memref<4x3xf32, #tpu.memory_space<smem>>
    %60 = vector.extract_strided_slice %0 {offsets = [1, 0, 0], sizes = [1, 1, 128], strides = [1, 1, 1]} : vector<3x1x128xf32> to vector<1x1x128xf32>
    %61 = vector.shape_cast %60 : vector<1x1x128xf32> to vector<1x128xf32>
    %62 = vector.broadcast %59 : f32 to vector<1x128xf32>
    %63 = arith.mulf %62, %61 : vector<1x128xf32>
    %64 = arith.addf %58, %63 : vector<1x128xf32>
    %c2_20 = arith.constant 2 : index
    %c2_21 = arith.constant 2 : index
    %65 = memref.load %arg2[%c2_20, %c2_21] : memref<4x3xf32, #tpu.memory_space<smem>>
    %66 = vector.extract_strided_slice %0 {offsets = [2, 0, 0], sizes = [1, 1, 128], strides = [1, 1, 1]} : vector<3x1x128xf32> to vector<1x1x128xf32>
    %67 = vector.shape_cast %66 : vector<1x1x128xf32> to vector<1x128xf32>
    %68 = vector.broadcast %65 : f32 to vector<1x128xf32>
    %69 = arith.mulf %68, %67 : vector<1x128xf32>
    %70 = arith.addf %64, %69 : vector<1x128xf32>
    %71 = arith.negf %70 : vector<1x128xf32>
    %72 = math.exp %71 : vector<1x128xf32>
    %cst_22 = arith.constant 1.000000e+00 : f32
    %73 = vector.broadcast %cst_22 : f32 to vector<1x128xf32>
    %74 = arith.addf %73, %72 : vector<1x128xf32>
    %75 = arith.divf %73, %74 : vector<1x128xf32>
    %c3 = arith.constant 3 : index
    %76 = memref.load %arg3[%c3] : memref<4xf32, #tpu.memory_space<smem>>
    %c3_23 = arith.constant 3 : index
    %c0_24 = arith.constant 0 : index
    %77 = memref.load %arg2[%c3_23, %c0_24] : memref<4x3xf32, #tpu.memory_space<smem>>
    %78 = vector.extract_strided_slice %0 {offsets = [0, 0, 0], sizes = [1, 1, 128], strides = [1, 1, 1]} : vector<3x1x128xf32> to vector<1x1x128xf32>
    %79 = vector.shape_cast %78 : vector<1x1x128xf32> to vector<1x128xf32>
    %80 = vector.broadcast %77 : f32 to vector<1x128xf32>
    %81 = arith.mulf %80, %79 : vector<1x128xf32>
    %82 = vector.broadcast %76 : f32 to vector<1x128xf32>
    %83 = arith.addf %82, %81 : vector<1x128xf32>
    %c3_25 = arith.constant 3 : index
    %c1_26 = arith.constant 1 : index
    %84 = memref.load %arg2[%c3_25, %c1_26] : memref<4x3xf32, #tpu.memory_space<smem>>
    %85 = vector.extract_strided_slice %0 {offsets = [1, 0, 0], sizes = [1, 1, 128], strides = [1, 1, 1]} : vector<3x1x128xf32> to vector<1x1x128xf32>
    %86 = vector.shape_cast %85 : vector<1x1x128xf32> to vector<1x128xf32>
    %87 = vector.broadcast %84 : f32 to vector<1x128xf32>
    %88 = arith.mulf %87, %86 : vector<1x128xf32>
    %89 = arith.addf %83, %88 : vector<1x128xf32>
    %c3_27 = arith.constant 3 : index
    %c2_28 = arith.constant 2 : index
    %90 = memref.load %arg2[%c3_27, %c2_28] : memref<4x3xf32, #tpu.memory_space<smem>>
    %91 = vector.extract_strided_slice %0 {offsets = [2, 0, 0], sizes = [1, 1, 128], strides = [1, 1, 1]} : vector<3x1x128xf32> to vector<1x1x128xf32>
    %92 = vector.shape_cast %91 : vector<1x1x128xf32> to vector<1x128xf32>
    %93 = vector.broadcast %90 : f32 to vector<1x128xf32>
    %94 = arith.mulf %93, %92 : vector<1x128xf32>
    %95 = arith.addf %89, %94 : vector<1x128xf32>
    %96 = arith.negf %95 : vector<1x128xf32>
    %97 = math.exp %96 : vector<1x128xf32>
    %cst_29 = arith.constant 1.000000e+00 : f32
    %98 = vector.broadcast %cst_29 : f32 to vector<1x128xf32>
    %99 = arith.addf %98, %97 : vector<1x128xf32>
    %100 = arith.divf %98, %99 : vector<1x128xf32>
    %c0_30 = arith.constant 0 : index
    %101 = memref.load %arg5[%c0_30] : memref<2xf32, #tpu.memory_space<smem>>
    %c0_31 = arith.constant 0 : index
    %c0_32 = arith.constant 0 : index
    %102 = memref.load %arg4[%c0_31, %c0_32] : memref<2x4xf32, #tpu.memory_space<smem>>
    %103 = vector.broadcast %102 : f32 to vector<1x128xf32>
    %104 = arith.mulf %103, %25 : vector<1x128xf32>
    %105 = vector.broadcast %101 : f32 to vector<1x128xf32>
    %106 = arith.addf %105, %104 : vector<1x128xf32>
    %c0_33 = arith.constant 0 : index
    %c1_34 = arith.constant 1 : index
    %107 = memref.load %arg4[%c0_33, %c1_34] : memref<2x4xf32, #tpu.memory_space<smem>>
    %108 = vector.broadcast %107 : f32 to vector<1x128xf32>
    %109 = arith.mulf %108, %50 : vector<1x128xf32>
    %110 = arith.addf %106, %109 : vector<1x128xf32>
    %c0_35 = arith.constant 0 : index
    %c2_36 = arith.constant 2 : index
    %111 = memref.load %arg4[%c0_35, %c2_36] : memref<2x4xf32, #tpu.memory_space<smem>>
    %112 = vector.broadcast %111 : f32 to vector<1x128xf32>
    %113 = arith.mulf %112, %75 : vector<1x128xf32>
    %114 = arith.addf %110, %113 : vector<1x128xf32>
    %c0_37 = arith.constant 0 : index
    %c3_38 = arith.constant 3 : index
    %115 = memref.load %arg4[%c0_37, %c3_38] : memref<2x4xf32, #tpu.memory_space<smem>>
    %116 = vector.broadcast %115 : f32 to vector<1x128xf32>
    %117 = arith.mulf %116, %100 : vector<1x128xf32>
    %118 = arith.addf %114, %117 : vector<1x128xf32>
    %119 = arith.negf %118 : vector<1x128xf32>
    %120 = math.exp %119 : vector<1x128xf32>
    %cst_39 = arith.constant 1.000000e+00 : f32
    %121 = vector.broadcast %cst_39 : f32 to vector<1x128xf32>
    %122 = arith.addf %121, %120 : vector<1x128xf32>
    %123 = arith.divf %121, %122 : vector<1x128xf32>
    %c0_40 = arith.constant 0 : index
    %c0_41 = arith.constant 0 : index
    %c0_42 = arith.constant 0 : index
    %124 = vector.load %arg6[%c0_40, %c0_41, %c0_42] : memref<2x1x128xf32, #tpu.memory_space<vmem>>, vector<1x1x128xf32>
    %125 = vector.shape_cast %124 : vector<1x1x128xf32> to vector<1x128xf32>
    %126 = vector.shape_cast %123 : vector<1x128xf32> to vector<1x1x128xf32>
    tpu.vector_store %arg6[%c0_40, %c0_41, %c0_42], %126 {strides = array<i32>} : memref<2x1x128xf32, #tpu.memory_space<vmem>>, vector<1x1x128xf32>,
    %c1_43 = arith.constant 1 : index
    %127 = memref.load %arg5[%c1_43] : memref<2xf32, #tpu.memory_space<smem>>
    %c1_44 = arith.constant 1 : index
    %c0_45 = arith.constant 0 : index
    %128 = memref.load %arg4[%c1_44, %c0_45] : memref<2x4xf32, #tpu.memory_space<smem>>
    %129 = vector.broadcast %128 : f32 to vector<1x128xf32>
    %130 = arith.mulf %129, %25 : vector<1x128xf32>
    %131 = vector.broadcast %127 : f32 to vector<1x128xf32>
    %132 = arith.addf %131, %130 : vector<1x128xf32>
    %c1_46 = arith.constant 1 : index
    %c1_47 = arith.constant 1 : index
    %133 = memref.load %arg4[%c1_46, %c1_47] : memref<2x4xf32, #tpu.memory_space<smem>>
    %134 = vector.broadcast %133 : f32 to vector<1x128xf32>
    %135 = arith.mulf %134, %50 : vector<1x128xf32>
    %136 = arith.addf %132, %135 : vector<1x128xf32>
    %c1_48 = arith.constant 1 : index
    %c2_49 = arith.constant 2 : index
    %137 = memref.load %arg4[%c1_48, %c2_49] : memref<2x4xf32, #tpu.memory_space<smem>>
    %138 = vector.broadcast %137 : f32 to vector<1x128xf32>
    %139 = arith.mulf %138, %75 : vector<1x128xf32>
    %140 = arith.addf %136, %139 : vector<1x128xf32>
    %c1_50 = arith.constant 1 : index
    %c3_51 = arith.constant 3 : index
    %141 = memref.load %arg4[%c1_50, %c3_51] : memref<2x4xf32, #tpu.memory_space<smem>>
    %142 = vector.broadcast %141 : f32 to vector<1x128xf32>
    %143 = arith.mulf %142, %100 : vector<1x128xf32>
    %144 = arith.addf %140, %143 : vector<1x128xf32>
    %145 = arith.negf %144 : vector<1x128xf32>
    %146 = math.exp %145 : vector<1x128xf32>
    %cst_52 = arith.constant 1.000000e+00 : f32
    %147 = vector.broadcast %cst_52 : f32 to vector<1x128xf32>
    %148 = arith.addf %147, %146 : vector<1x128xf32>
    %149 = arith.divf %147, %148 : vector<1x128xf32>
    %c1_53 = arith.constant 1 : index
    %c0_54 = arith.constant 0 : index
    %c0_55 = arith.constant 0 : index
    %150 = vector.load %arg6[%c1_53, %c0_54, %c0_55] : memref<2x1x128xf32, #tpu.memory_space<vmem>>, vector<1x1x128xf32>
    %151 = vector.shape_cast %150 : vector<1x1x128xf32> to vector<1x128xf32>
    %152 = vector.shape_cast %149 : vector<1x128xf32> to vector<1x1x128xf32>
    tpu.vector_store %arg6[%c1_53, %c0_54, %c0_55], %152 {strides = array<i32>} : memref<2x1x128xf32, #tpu.memory_space<vmem>>, vector<1x1x128xf32>,
    return
  }
  func.func @transform_0(%arg0: i32) -> (i32, i32, i32) {
    %c0_i32 = arith.constant 0 : i32
    %c0_i32_0 = arith.constant 0 : i32
    %c0_i32_1 = arith.constant 0 : i32
    return %c0_i32, %arg0, %c0_i32_0 : i32, i32, i32
  }
  func.func @transform_1(%arg0: i32) -> (i32, i32) {
    %c0_i32 = arith.constant 0 : i32
    %c0_i32_0 = arith.constant 0 : i32
    %c0_i32_1 = arith.constant 0 : i32
    return %c0_i32, %c0_i32_0 : i32, i32
  }
  func.func @transform_2(%arg0: i32) -> i32 {
    %c0_i32 = arith.constant 0 : i32
    %c0_i32_0 = arith.constant 0 : i32
    return %c0_i32 : i32
  }
  func.func @transform_3(%arg0: i32) -> (i32, i32) {
    %c0_i32 = arith.constant 0 : i32
    %c0_i32_0 = arith.constant 0 : i32
    %c0_i32_1 = arith.constant 0 : i32
    return %c0_i32, %c0_i32_0 : i32, i32
  }
  func.func @transform_4(%arg0: i32) -> i32 {
    %c0_i32 = arith.constant 0 : i32
    %c0_i32_0 = arith.constant 0 : i32
    return %c0_i32 : i32
  }
  func.func @transform_5(%arg0: i32) -> (i32, i32, i32) {
    %c0_i32 = arith.constant 0 : i32
    %c0_i32_0 = arith.constant 0 : i32
    %c0_i32_1 = arith.constant 0 : i32
    return %c0_i32, %arg0, %c0_i32_0 : i32, i32, i32
  }
}

</mosaic_0001>

<llo_original>
// kernel: tpu_custom_call.1
$region0: #{tpu_custom_call.1}
  #allocation0 [shape = 'u32[]', space=smem, size = 0x4, offset = 0x4, fixed_abs, tag = 'smem constant byte address 0x4 - core index']
  #allocation1 [shape = 'u32[144,128]{1,0:T(1,128)}', space=vmem, size = 0x12000, scoped, tag = 'internal scratch']
  %s0 = inlined_call_operand.hbm [shape: f32[3,1,128], index: 0, kind: input, shape index: {}]
  %s1 = inlined_call_operand.hbm [shape: f32[4,3], index: 1, kind: input, shape index: {}]
  %s2 = inlined_call_operand.vmem [shape: f32[4], index: 2, kind: input, shape index: {}]
  %s3 = inlined_call_operand.vmem [shape: f32[2,4], index: 3, kind: input, shape index: {}]
  %s4 = inlined_call_operand.vmem [shape: f32[2], index: 4, kind: input, shape index: {}]
  %s5 = inlined_call_operand.hbm [shape: f32[2,1,128], index: 5, kind: output, shape index: {}]
  %s6 = sld [smem:[#allocation0]]
  $region50: #{tpu_custom_call.1} parent=0
    _
  %s8 = ssub.s32 1, %s6
  %s9 = scalar_select 0, %s8, %s6
  $region1: #{tpu_custom_call.1} parent=0
    #allocation2 [shape = 'u8[1536]{0}', space=vmem, size = 0x800, scoped, tag = 'input window, operand 0, single buffered']
    #allocation3 [shape = 's32[1]{0}', space=sflag, size = 0x4, scoped, tag = 'scoped memory for tpu_custom_call.1']
    #allocation4 [shape = 's32[1]{0}', space=sflag, size = 0x4, scoped, tag = 'scoped memory for tpu_custom_call.1']
    #allocation5 [shape = 's32[1]{0}', space=sflag, size = 0x4, scoped, tag = 'scoped memory for tpu_custom_call.1']
    #allocation6 [shape = 's32[1]{0}', space=sflag, size = 0x4, scoped, tag = 'scoped memory for tpu_custom_call.1']
    #allocation7 [shape = 'u8[2048]{0}', space=smem, size = 0x800, scoped, tag = 'input window, operand 1, single buffered']
    #allocation8 [shape = 'u8[512]{0}', space=smem, size = 0x200, scoped, tag = 'input window, operand 2, single buffered']
    #allocation9 [shape = 'u8[1024]{0}', space=smem, size = 0x400, scoped, tag = 'input window, operand 3, single buffered']
    #allocation10 [shape = 's32[1]{0}', space=sflag, size = 0x4, scoped, tag = 'scoped memory for tpu_custom_call.1']
    #allocation11 [shape = 'u8[512]{0}', space=smem, size = 0x200, scoped, tag = 'input window, operand 4, single buffered']
    #allocation12 [shape = 'u8[1024]{0}', space=vmem, size = 0x400, scoped, tag = 'output window, operand 0, single buffered']
    %10 = vsyncpa [#allocation3], 0
    %11 = vsyncpa [#allocation5], 0
    %12 = vsyncpa [#allocation6], 0
    %13 = vsyncpa [#allocation10], 0
    %14 = vsyncpa [#allocation4], 0
    // Predicated region
    $region2: #{tpu_custom_call.1} parent=1 // pred_check
      _
    $region3: #{tpu_custom_call.1} parent=1 // pred_check_branch
      %16 = sbr.rel (0) target = $region5
    $region4: #{tpu_custom_call.1} parent=1 // pred_region
      %s18 = ssub.s32 48, 48
      %19 = vsyncadd [#allocation3], %s18
      %s20 = sshll.u32 [#allocation2], 4
      %s21 = int_to_ptr.vmem [resolvable:$true] %s20
      %26 = dma.hbm_to_vmem [thread:$0]  %s0, 48, %s21, [#allocation3], 16, 16, 1
    $region5: #{tpu_custom_call.1} parent=1 // pred_fallthru
      _
    // Predicated region
    $region6: #{tpu_custom_call.1} parent=1 // pred_check
      _
    $region7: #{tpu_custom_call.1} parent=1 // pred_check_branch
      %28 = sbr.rel (0) target = $region9
    $region8: #{tpu_custom_call.1} parent=1 // pred_region
      %s30 = ssub.s32 64, 64
      %31 = vsyncadd [#allocation5], %s30
      %34 = dma.hbm_to_smem %s1, 64, [#allocation7], [#allocation5]
    $region9: #{tpu_custom_call.1} parent=1 // pred_fallthru
      _
    // Predicated region
    $region10: #{tpu_custom_call.1} parent=1 // pred_check
      _
    $region11: #{tpu_custom_call.1} parent=1 // pred_check_branch
      %36 = sbr.rel (0) target = $region13
    $region12: #{tpu_custom_call.1} parent=1 // pred_region
      %s38 = ssub.s32 16, 16
      %39 = vsyncadd [#allocation6], %s38
      %s41 = sshll.u32 %s2, 4
      %s42 = int_to_ptr.vmem [resolvable:$true] %s41
      %44 = dma.vmem_to_smem %s42, 16, [#allocation8], [#allocation6]
    $region13: #{tpu_custom_call.1} parent=1 // pred_fallthru
      _
    // Predicated region
    $region14: #{tpu_custom_call.1} parent=1 // pred_check
      _
    $region15: #{tpu_custom_call.1} parent=1 // pred_check_branch
      %46 = sbr.rel (0) target = $region17
    $region16: #{tpu_custom_call.1} parent=1 // pred_region
      %s48 = ssub.s32 32, 32
      %49 = vsyncadd [#allocation10], %s48
      %s51 = sshll.u32 %s3, 4
      %s52 = int_to_ptr.vmem [resolvable:$true] %s51
      %54 = dma.vmem_to_smem %s52, 32, [#allocation9], [#allocation10]
    $region17: #{tpu_custom_call.1} parent=1 // pred_fallthru
      _
    // Predicated region
    $region18: #{tpu_custom_call.1} parent=1 // pred_check
      _
    $region19: #{tpu_custom_call.1} parent=1 // pred_check_branch
      %56 = sbr.rel (0) target = $region21
    $region20: #{tpu_custom_call.1} parent=1 // pred_region
      %s58 = ssub.s32 16, 16
      %59 = vsyncadd [#allocation10], %s58
      %s61 = sshll.u32 %s4, 4
      %s62 = int_to_ptr.vmem [resolvable:$true] %s61
      %64 = dma.vmem_to_smem %s62, 16, [#allocation11], [#allocation10]
    $region21: #{tpu_custom_call.1} parent=1 // pred_fallthru
      _
    // Predicated region
    $region22: #{tpu_custom_call.1} parent=1 // pred_check
      _
    $region23: #{tpu_custom_call.1} parent=1 // pred_check_branch
      %66 = sbr.rel (0) target = $region25
    $region24: #{tpu_custom_call.1} parent=1 // pred_region
      %67 = dma.done [#allocation3], 48
    $region25: #{tpu_custom_call.1} parent=1 // pred_fallthru
      _
    // Predicated region
    $region26: #{tpu_custom_call.1} parent=1 // pred_check
      _
    $region27: #{tpu_custom_call.1} parent=1 // pred_check_branch
      %69 = sbr.rel (0) target = $region29
    $region28: #{tpu_custom_call.1} parent=1 // pred_region
      %70 = dma.done [#allocation5], 64
    $region29: #{tpu_custom_call.1} parent=1 // pred_fallthru
      _
    // Predicated region
    $region30: #{tpu_custom_call.1} parent=1 // pred_check
      _
    $region31: #{tpu_custom_call.1} parent=1 // pred_check_branch
      %72 = sbr.rel (0) target = $region33
    $region32: #{tpu_custom_call.1} parent=1 // pred_region
      %73 = dma.done [#allocation6], 16
    $region33: #{tpu_custom_call.1} parent=1 // pred_fallthru
      _
    // Predicated region
    $region34: #{tpu_custom_call.1} parent=1 // pred_check
      _
    $region35: #{tpu_custom_call.1} parent=1 // pred_check_branch
      %75 = sbr.rel (0) target = $region37
    $region36: #{tpu_custom_call.1} parent=1 // pred_region
      %76 = dma.done [#allocation10], 32
    $region37: #{tpu_custom_call.1} parent=1 // pred_fallthru
      _
    // Predicated region
    $region38: #{tpu_custom_call.1} parent=1 // pred_check
      _
    $region39: #{tpu_custom_call.1} parent=1 // pred_check_branch
      %78 = sbr.rel (0) target = $region41
    $region40: #{tpu_custom_call.1} parent=1 // pred_region
      %79 = dma.done [#allocation10], 16
    $region41: #{tpu_custom_call.1} parent=1 // pred_fallthru
      _
    %80 = sfence
    %v81 = vld [vmem:[#allocation2] sm:$0x1]
    %v82 = vld [vmem:[#allocation2 + $0x1] sm:$0x1]
    %v83 = vld [vmem:[#allocation2 + $0x2] sm:$0x1]
    %s84 = sld [smem:[#allocation8]]
    %s85 = sld [smem:[#allocation7]]
    %v86 = vstv %s85
    %v87 = vmul.f32 %v86, %v81
    %v88 = vstv %s84
    %v89 = vadd.f32 %v88, %v87
    %s90 = sld [smem:[#allocation7 + $0x1]]
    %v91 = vstv %s90
    %v92 = vmul.f32 %v91, %v82
    %v93 = vadd.f32 %v89, %v92
    %s94 = sld [smem:[#allocation7 + $0x2]]
    %v95 = vstv %s94
    %v96 = vmul.f32 %v95, %v83
    %v97 = vadd.f32 %v93, %v96
    %v98 = vxor.u32 %v97, 2147483648
    %v99 = vmul.f32 %v98, 1.442695
    %v100 = vpow.pop %v99
    %v101 = vadd.f32 %v100, 1.0
    %v102 = vrcp.pop %v101
    %v103 = vmul.f32 1.0, %v102
    %s104 = sld [smem:[#allocation8 + $0x1]]
    %s105 = sld [smem:[#allocation7 + $0x80]]
    %v106 = vstv %s105
    %v107 = vmul.f32 %v106, %v81
    %v108 = vstv %s104
    %v109 = vadd.f32 %v108, %v107
    %s110 = sld [smem:[#allocation7 + $0x81]]
    %v111 = vstv %s110
    %v112 = vmul.f32 %v111, %v82
    %v113 = vadd.f32 %v109, %v112
    %s114 = sld [smem:[#allocation7 + $0x82]]
    %v115 = vstv %s114
    %v116 = vmul.f32 %v115, %v83
    %v117 = vadd.f32 %v113, %v116
    %v118 = vxor.u32 %v117, 2147483648
    %v119 = vmul.f32 %v118, 1.442695
    %v120 = vpow.pop %v119
    %v121 = vadd.f32 %v120, 1.0
    %v122 = vrcp.pop %v121
    %v123 = vmul.f32 1.0, %v122
    %s124 = sld [smem:[#allocation8 + $0x2]]
    %s125 = sld [smem:[#allocation7 + $0x100]]
    %v126 = vstv %s125
    %v127 = vmul.f32 %v126, %v81
    %v128 = vstv %s124
    %v129 = vadd.f32 %v128, %v127
    %s130 = sld [smem:[#allocation7 + $0x101]]
    %v131 = vstv %s130
    %v132 = vmul.f32 %v131, %v82
    %v133 = vadd.f32 %v129, %v132
    %s134 = sld [smem:[#allocation7 + $0x102]]
    %v135 = vstv %s134
    %v136 = vmul.f32 %v135, %v83
    %v137 = vadd.f32 %v133, %v136
    %v138 = vxor.u32 %v137, 2147483648
    %v139 = vmul.f32 %v138, 1.442695
    %v140 = vpow.pop %v139
    %v141 = vadd.f32 %v140, 1.0
    %v142 = vrcp.pop %v141
    %v143 = vmul.f32 1.0, %v142
    %s144 = sld [smem:[#allocation8 + $0x3]]
    %s145 = sld [smem:[#allocation7 + $0x180]]
    %v146 = vstv %s145
    %v147 = vmul.f32 %v146, %v81
    %v148 = vstv %s144
    %v149 = vadd.f32 %v148, %v147
    %s150 = sld [smem:[#allocation7 + $0x181]]
    %v151 = vstv %s150
    %v152 = vmul.f32 %v151, %v82
    %v153 = vadd.f32 %v149, %v152
    %s154 = sld [smem:[#allocation7 + $0x182]]
    %v155 = vstv %s154
    %v156 = vmul.f32 %v155, %v83
    %v157 = vadd.f32 %v153, %v156
    %v158 = vxor.u32 %v157, 2147483648
    %v159 = vmul.f32 %v158, 1.442695
    %v160 = vpow.pop %v159
    %v161 = vadd.f32 %v160, 1.0
    %v162 = vrcp.pop %v161
    %v163 = vmul.f32 1.0, %v162
    %s164 = sld [smem:[#allocation11]]
    %s165 = sld [smem:[#allocation9]]
    %v166 = vstv %s165
    %v167 = vmul.f32 %v166, %v103
    %v168 = vstv %s164
    %v169 = vadd.f32 %v168, %v167
    %s170 = sld [smem:[#allocation9 + $0x1]]
    %v171 = vstv %s170
    %v172 = vmul.f32 %v171, %v123
    %v173 = vadd.f32 %v169, %v172
    %s174 = sld [smem:[#allocation9 + $0x2]]
    %v175 = vstv %s174
    %v176 = vmul.f32 %v175, %v143
    %v177 = vadd.f32 %v173, %v176
    %s178 = sld [smem:[#allocation9 + $0x3]]
    %v179 = vstv %s178
    %v180 = vmul.f32 %v179, %v163
    %v181 = vadd.f32 %v177, %v180
    %v182 = vxor.u32 %v181, 2147483648
    %v183 = vmul.f32 %v182, 1.442695
    %v184 = vpow.pop %v183
    %v185 = vadd.f32 %v184, 1.0
    %v186 = vrcp.pop %v185
    %v187 = vmul.f32 1.0, %v186
    %188 = vst [vmem:[#allocation12] sm:$0x1] %v187
    %s189 = sld [smem:[#allocation11 + $0x1]]
    %s190 = sld [smem:[#allocation9 + $0x80]]
    %v191 = vstv %s190
    %v192 = vmul.f32 %v191, %v103
    %v193 = vstv %s189
    %v194 = vadd.f32 %v193, %v192
    %s195 = sld [smem:[#allocation9 + $0x81]]
    %v196 = vstv %s195
    %v197 = vmul.f32 %v196, %v123
    %v198 = vadd.f32 %v194, %v197
    %s199 = sld [smem:[#allocation9 + $0x82]]
    %v200 = vstv %s199
    %v201 = vmul.f32 %v200, %v143
    %v202 = vadd.f32 %v198, %v201
    %s203 = sld [smem:[#allocation9 + $0x83]]
    %v204 = vstv %s203
    %v205 = vmul.f32 %v204, %v163
    %v206 = vadd.f32 %v202, %v205
    %v207 = vxor.u32 %v206, 2147483648
    %v208 = vmul.f32 %v207, 1.442695
    %v209 = vpow.pop %v208
    %v210 = vadd.f32 %v209, 1.0
    %v211 = vrcp.pop %v210
    %v212 = vmul.f32 1.0, %v211
    %s213 = scalar_lea.vmem [#allocation12], 1
    %214 = vst [vmem:[%s213] sm:$0x1] %v212
    // Predicated region
    $region42: #{tpu_custom_call.1} parent=1 // pred_check
      _
    $region43: #{tpu_custom_call.1} parent=1 // pred_check_branch
      %216 = sbr.rel (0) target = $region45
    $region44: #{tpu_custom_call.1} parent=1 // pred_region
      %s218 = ssub.s32 32, 32
      %219 = vsyncadd [#allocation4], %s218
      %s220 = sshll.u32 [#allocation12], 4
      %s221 = int_to_ptr.vmem [resolvable:$true] %s220
      %226 = dma.vmem_to_hbm [thread:$0]  %s221, 32, %s5, [#allocation4], 16, 16, 1
    $region45: #{tpu_custom_call.1} parent=1 // pred_fallthru
      _
    // Predicated region
    $region46: #{tpu_custom_call.1} parent=1 // pred_check
      _
    $region47: #{tpu_custom_call.1} parent=1 // pred_check_branch
      %228 = sbr.rel (0) target = $region49
    $region48: #{tpu_custom_call.1} parent=1 // pred_region
      %229 = dma.done [#allocation4], 32
    $region49: #{tpu_custom_call.1} parent=1 // pred_fallthru
      _
    %230 = vsyncpa [#allocation3], 1
    %231 = vsyncpa [#allocation4], 1
    %232 = vsyncpa [#allocation5], 1
    %233 = vsyncpa [#allocation6], 1
    %234 = vsyncpa [#allocation10], 1

</llo_original>
